<compile_context>
chip_gen: v7x
topology: tpu7x:2x2x1
jax: 0.10.0
libtpu: 0.0.40
codegen_flags: <defaults>
</compile_context>

<pallas_src>
import jax
import jax.numpy as jnp
from jax.experimental import pallas as pl
from jax.experimental.pallas import tpu as pltpu


# --------------------------------------------------------------------------
# Pallas kernel: 4x (Linear + ReLU/identity) MLP on one (TILE_M, E) row tile.
# Weights/biases are whole-array VMEM-resident blocks (constant index maps).
# --------------------------------------------------------------------------
def _mlp_kernel(x_ref,
                w1_ref, b1_ref,
                w2_ref, b2_ref,
                w3_ref, b3_ref,
                w4_ref, b4_ref,
                o_ref):
    wdt = w1_ref.dtype  # matmul operand dtype (bf16 by default, f32 fallback)

    h = jnp.dot(x_ref[...].astype(wdt), w1_ref[...],
                preferred_element_type=jnp.float32)        # (tm, 128)
    h = jnp.maximum(h + b1_ref[...], 0.0)

    h = jnp.dot(h.astype(wdt), w2_ref[...],
                preferred_element_type=jnp.float32)        # (tm, 128)
    h = jnp.maximum(h + b2_ref[...], 0.0)

    h = jnp.dot(h.astype(wdt), w3_ref[...],
                preferred_element_type=jnp.float32)        # (tm, 128)
    h = jnp.maximum(h + b3_ref[...], 0.0)

    h = jnp.dot(h.astype(wdt), w4_ref[...],
                preferred_element_type=jnp.float32)        # (tm, out_dim)
    o_ref[...] = (h + b4_ref[...]).astype(o_ref.dtype)


def _round_up(x, m):
    return (x + m - 1) // m * m


# --------------------------------------------------------------------------
# One-time weight preparation (padding + dtype cast) — NOT per call.
# Hidden widths are zero-padded to 128 lanes so intermediates are lane-dense;
# padded layer-1 activations are ReLU(0 + 0) = 0 and the matching padded rows
# of w2 are zero, so numerics are unchanged.  The final layer keeps its true
# out_dim columns (no HBM inflation of the output).
# --------------------------------------------------------------------------
def prepare_kernel_params(params, *, compute_dtype=jnp.bfloat16):
    def pad2(a, rows, cols, dtype):
        r, c = a.shape
        return jnp.pad(a, ((0, rows - r), (0, cols - c))).astype(dtype)

    E = params["w1"].shape[0]
    out_dim = params["w4"].shape[1]
    H = 128
    return {
        "w1": pad2(params["w1"], E, H, compute_dtype),
        "b1": pad2(params["b1"], 1, H, jnp.float32),
        "w2": pad2(params["w2"], H, H, compute_dtype),
        "b2": pad2(params["b2"], 1, H, jnp.float32),
        "w3": pad2(params["w3"], H, H, compute_dtype),
        "b3": pad2(params["b3"], 1, H, jnp.float32),
        "w4": pad2(params["w4"], H, out_dim, compute_dtype),
        "b4": pad2(params["b4"], 1, out_dim, jnp.float32),
    }


def mlp_pallas(x_flat, kp, *, tile_m=2048):
    """x_flat: (M, E) token matrix (bf16 or f32). Returns (M, out_dim) f32."""
    M, E = x_flat.shape
    out_dim = kp["w4"].shape[1]

    # Tile rows; no wrapper-side padding — Pallas clips the ragged last block.
    tm = min(tile_m, _round_up(M, 8))
    # Keep >= 2 grid steps for moderately large M so v7x's two TensorCores
    # both get work (v5e/v6e single-TC, unaffected).
    if M > 1024 and pl.cdiv(M, tm) < 2:
        tm = _round_up(pl.cdiv(M, 2), 8)
    grid = (pl.cdiv(M, tm),)

    x_spec = pl.BlockSpec((tm, E), lambda i: (i, 0))
    out_spec = pl.BlockSpec((tm, out_dim), lambda i: (i, 0))
    # Constant-index -> stays VMEM-resident across grid steps.
    # TODO(synk): single-buffer these (pl.Buffered(1)) once buffer_count=1 is
    # accepted for constant-index blocks; the second buffer wastes ~0.1 MB.
    resident = lambda a: pl.BlockSpec(a.shape, lambda i: (0, 0))

    H1 = kp["w1"].shape[1]
    H2 = kp["w2"].shape[1]
    H3 = kp["w3"].shape[1]
    flops = 2 * M * (E * H1 + H1 * H2 + H2 * H3 + H3 * out_dim)
    bytes_accessed = (x_flat.size * x_flat.dtype.itemsize
                      + M * out_dim * 4
                      + sum(v.size * v.dtype.itemsize for v in kp.values()))

    return pl.pallas_call(
        _mlp_kernel,
        out_shape=jax.ShapeDtypeStruct((M, out_dim), jnp.float32),
        grid=grid,
        in_specs=[
            x_spec,
            resident(kp["w1"]), resident(kp["b1"]),
            resident(kp["w2"]), resident(kp["b2"]),
            resident(kp["w3"]), resident(kp["b3"]),
            resident(kp["w4"]), resident(kp["b4"]),
        ],
        out_specs=out_spec,
        compiler_params=pltpu.CompilerParams(
            dimension_semantics=("parallel",),
            vmem_limit_bytes=32 * 1024 * 1024,
            # Allow XLA to fuse the embedding gather / bf16 cast into the X
            # input stream (it may decline; correctness unaffected).
            allow_input_fusion=[True] + [False] * 8,
        ),
        cost_estimate=pl.CostEstimate(
            flops=flops, transcendentals=0, bytes_accessed=bytes_accessed),
    )(x_flat, kp["w1"], kp["b1"], kp["w2"], kp["b2"],
      kp["w3"], kp["b3"], kp["w4"], kp["b4"])


# --------------------------------------------------------------------------
# Model wrapper (embedding gather + reshape glue in plain JAX).
# --------------------------------------------------------------------------
def init_params(key, n_ent, embed_dim, input_dim, output_dim):
    assert input_dim == embed_dim, "linear1 consumes the embedding directly"
    keys = jax.random.split(key, 9)

    def linear(kw, kb, fan_in, fan_out):
        # mimic PyTorch default uniform(-1/sqrt(fan_in), 1/sqrt(fan_in)) init
        bound = 1.0 / jnp.sqrt(jnp.float32(fan_in))
        w = jax.random.uniform(kw, (fan_in, fan_out), jnp.float32, -bound, bound)
        b = jax.random.uniform(kb, (1, fan_out), jnp.float32, -bound, bound)
        return w, b

    emb = jax.random.normal(keys[0], (n_ent, embed_dim), jnp.float32)
    w1, b1 = linear(keys[1], keys[2], input_dim, 64)
    w2, b2 = linear(keys[3], keys[4], 64, 128)
    w3, b3 = linear(keys[5], keys[6], 128, 128)
    w4, b4 = linear(keys[7], keys[8], 128, output_dim)
    return {"emb": emb,
            "w1": w1, "b1": b1, "w2": w2, "b2": b2,
            "w3": w3, "b3": b3, "w4": w4, "b4": b4}


def rating_model_forward(x_idx, emb, kparams):
    """x_idx: (B, 2) int32 of [user, item] entity ids.

    Matches the PyTorch RatingModel.forward: the MLP is computed (inside the
    Pallas kernel) but the function returns x unchanged.  The MLP activations
    are returned second purely so callers can block on / inspect the output.
    """
    B = x_idx.shape[0]
    # Row-major flatten of (B, 2) gives the same row order as
    # torch.stack([user_embed, item_embed], dim=1).reshape(2B, E).
    flat_idx = x_idx.reshape(-1)                          # (2B,)
    wdt = kparams["w1"].dtype
    flat = emb[flat_idx].astype(wdt)                      # (2B, E) gather+cast

    mlp_out = mlp_pallas(flat, kparams)                   # (2B, out_dim) f32
    mlp_out = mlp_out.reshape(B, 2, -1)                   # (B, 2, out_dim)
    return x_idx, mlp_out                                 # forward() returns x


# --------------------------------------------------------------------------
if __name__ == "__main__":
    key = jax.random.PRNGKey(0)
    k_param, k_idx = jax.random.split(key)

    # small, self-consistent shapes
    n_ent = 100          # loader.n_ent
    embed_dim = 32
    input_dim = 32       # must equal embed_dim for linear1 to be applicable
    output_dim = 8       # e.g. num rating classes
    batch = 8

    params = init_params(k_param, n_ent, embed_dim, input_dim, output_dim)
    kparams = prepare_kernel_params(params)      # pad + bf16-cast ONCE

    fwd = jax.jit(rating_model_forward)

    x = jax.random.randint(k_idx, (batch, 2), 0, n_ent, dtype=jnp.int32)
    x_out, mlp_out = fwd(x, params["emb"], kparams)
    jax.block_until_ready((x_out, mlp_out))

    # sanity: forward() returns x unchanged, MLP shape is (B, 2, output_dim)
    assert x_out.shape == (batch, 2) and bool(jnp.all(x_out == x))
    assert mlp_out.shape == (batch, 2, output_dim)

    # references: exact-f32 MLP and the bf16-matmul MLP the kernel implements
    def ref_mlp_f32(f):
        h = jnp.maximum(f @ params["w1"] + params["b1"], 0.0)
        h = jnp.maximum(h @ params["w2"] + params["b2"], 0.0)
        h = jnp.maximum(h @ params["w3"] + params["b3"], 0.0)
        return h @ params["w4"] + params["b4"]

    def ref_mlp_bf16(f):
        wdt = jnp.bfloat16
        h = jnp.dot(f.astype(wdt), params["w1"].astype(wdt),
                    preferred_element_type=jnp.float32) + params["b1"]
        h = jnp.maximum(h, 0.0)
        h = jnp.dot(h.astype(wdt), params["w2"].astype(wdt),
                    preferred_element_type=jnp.float32) + params["b2"]
        h = jnp.maximum(h, 0.0)
        h = jnp.dot(h.astype(wdt), params["w3"].astype(wdt),
                    preferred_element_type=jnp.float32) + params["b3"]
        h = jnp.maximum(h, 0.0)
        return jnp.dot(h.astype(wdt), params["w4"].astype(wdt),
                       preferred_element_type=jnp.float32) + params["b4"]

    gathered = params["emb"][x.reshape(-1)]
    got = mlp_out.reshape(batch * 2, output_dim)
    assert bool(jnp.allclose(got, ref_mlp_bf16(gathered), atol=1e-4, rtol=1e-4))
    # loose check against the pure-f32 reference (bf16 matmuls are not bit-exact)
    assert bool(jnp.allclose(got, ref_mlp_f32(gathered), atol=5e-2, rtol=5e-2))

    # exercise a multi-tile grid with a ragged last block (M = 6000, tm = 2048)
    big_B = 3000
    xb = jax.random.randint(jax.random.PRNGKey(1), (big_B, 2), 0, n_ent,
                            dtype=jnp.int32)
    _, big_out = fwd(xb, params["emb"], kparams)
    jax.block_until_ready(big_out)
    fb = params["emb"][xb.reshape(-1)]
    assert bool(jnp.allclose(big_out.reshape(big_B * 2, output_dim),
                             ref_mlp_bf16(fb), atol=1e-4, rtol=1e-4))

    print("KERNEL_OK")
</pallas_src>

<mosaic_0001>
module attributes {stable_mosaic.version = 11 : i64} {
  func.func @_mlp_kernel(%arg0: i32, %arg1: memref<16x32xbf16, #tpu.memory_space<vmem>>, %arg2: memref<32x128xbf16, #tpu.memory_space<vmem>>, %arg3: memref<1x128xf32, #tpu.memory_space<vmem>>, %arg4: memref<128x128xbf16, #tpu.memory_space<vmem>>, %arg5: memref<1x128xf32, #tpu.memory_space<vmem>>, %arg6: memref<128x128xbf16, #tpu.memory_space<vmem>>, %arg7: memref<1x128xf32, #tpu.memory_space<vmem>>, %arg8: memref<128x8xbf16, #tpu.memory_space<vmem>>, %arg9: memref<1x8xf32, #tpu.memory_space<vmem>>, %arg10: memref<16x8xf32, #tpu.memory_space<vmem>>) attributes {dimension_semantics = [#tpu.dimension_semantics<parallel>], iteration_bounds = array<i64: 1>, scalar_prefetch = 0 : i64, scratch_operands = 0 : i64, tpu.core_type = #tpu.core_type<tc>, window_params = [{transform_indices = @transform_0, window_bounds = array<i64: 16, 32>}, {pipeline_mode = #tpu.pipeline_mode<synchronous>, transform_indices = @transform_1, window_bounds = array<i64: 32, 128>}, {pipeline_mode = #tpu.pipeline_mode<synchronous>, transform_indices = @transform_2, window_bounds = array<i64: 1, 128>}, {pipeline_mode = #tpu.pipeline_mode<synchronous>, transform_indices = @transform_3, window_bounds = array<i64: 128, 128>}, {pipeline_mode = #tpu.pipeline_mode<synchronous>, transform_indices = @transform_4, window_bounds = array<i64: 1, 128>}, {pipeline_mode = #tpu.pipeline_mode<synchronous>, transform_indices = @transform_5, window_bounds = array<i64: 128, 128>}, {pipeline_mode = #tpu.pipeline_mode<synchronous>, transform_indices = @transform_6, window_bounds = array<i64: 1, 128>}, {pipeline_mode = #tpu.pipeline_mode<synchronous>, transform_indices = @transform_7, window_bounds = array<i64: 128, 8>}, {pipeline_mode = #tpu.pipeline_mode<synchronous>, transform_indices = @transform_8, window_bounds = array<i64: 1, 8>}, {transform_indices = @transform_9, window_bounds = array<i64: 16, 8>}]} {
    %c0 = arith.constant 0 : index
    %c0_0 = arith.constant 0 : index
    %0 = vector.load %arg1[%c0, %c0_0] : memref<16x32xbf16, #tpu.memory_space<vmem>>, vector<16x32xbf16>
    %c0_1 = arith.constant 0 : index
    %c0_2 = arith.constant 0 : index
    %1 = vector.load %arg2[%c0_1, %c0_2] : memref<32x128xbf16, #tpu.memory_space<vmem>>, vector<32x128xbf16>
    %cst = arith.constant dense<0.000000e+00> : vector<16x128xf32>
    %2 = tpu.matmul %0, %1, %cst {dimension_numbers = #tpu.dot_dimension_numbers<[1], [0], [0], [1], [0, 0, 1, 1], [], []>} : vector<16x32xbf16>, vector<32x128xbf16>, vector<16x128xf32> -> vector<16x128xf32>
    %c0_3 = arith.constant 0 : index
    %c0_4 = arith.constant 0 : index
    %3 = vector.load %arg3[%c0_3, %c0_4] : memref<1x128xf32, #tpu.memory_space<vmem>>, vector<1x128xf32>
    %4 = vector.broadcast %3 : vector<1x128xf32> to vector<16x128xf32>
    %5 = arith.addf %2, %4 : vector<16x128xf32>
    %cst_5 = arith.constant 0.000000e+00 : f32
    %6 = vector.broadcast %cst_5 : f32 to vector<16x128xf32>
    %7 = arith.maximumf %5, %6 : vector<16x128xf32>
    %8 = arith.truncf %7 : vector<16x128xf32> to vector<16x128xbf16>
    %c0_6 = arith.constant 0 : index
    %c0_7 = arith.constant 0 : index
    %9 = vector.load %arg4[%c0_6, %c0_7] : memref<128x128xbf16, #tpu.memory_space<vmem>>, vector<128x128xbf16>
    %cst_8 = arith.constant dense<0.000000e+00> : vector<16x128xf32>
    %10 = tpu.matmul %8, %9, %cst_8 {dimension_numbers = #tpu.dot_dimension_numbers<[1], [0], [0], [1], [0, 0, 1, 1], [], []>} : vector<16x128xbf16>, vector<128x128xbf16>, vector<16x128xf32> -> vector<16x128xf32>
    %c0_9 = arith.constant 0 : index
    %c0_10 = arith.constant 0 : index
    %11 = vector.load %arg5[%c0_9, %c0_10] : memref<1x128xf32, #tpu.memory_space<vmem>>, vector<1x128xf32>
    %12 = vector.broadcast %11 : vector<1x128xf32> to vector<16x128xf32>
    %13 = arith.addf %10, %12 : vector<16x128xf32>
    %cst_11 = arith.constant 0.000000e+00 : f32
    %14 = vector.broadcast %cst_11 : f32 to vector<16x128xf32>
    %15 = arith.maximumf %13, %14 : vector<16x128xf32>
    %16 = arith.truncf %15 : vector<16x128xf32> to vector<16x128xbf16>
    %c0_12 = arith.constant 0 : index
    %c0_13 = arith.constant 0 : index
    %17 = vector.load %arg6[%c0_12, %c0_13] : memref<128x128xbf16, #tpu.memory_space<vmem>>, vector<128x128xbf16>
    %cst_14 = arith.constant dense<0.000000e+00> : vector<16x128xf32>
    %18 = tpu.matmul %16, %17, %cst_14 {dimension_numbers = #tpu.dot_dimension_numbers<[1], [0], [0], [1], [0, 0, 1, 1], [], []>} : vector<16x128xbf16>, vector<128x128xbf16>, vector<16x128xf32> -> vector<16x128xf32>
    %c0_15 = arith.constant 0 : index
    %c0_16 = arith.constant 0 : index
    %19 = vector.load %arg7[%c0_15, %c0_16] : memref<1x128xf32, #tpu.memory_space<vmem>>, vector<1x128xf32>
    %20 = vector.broadcast %19 : vector<1x128xf32> to vector<16x128xf32>
    %21 = arith.addf %18, %20 : vector<16x128xf32>
    %cst_17 = arith.constant 0.000000e+00 : f32
    %22 = vector.broadcast %cst_17 : f32 to vector<16x128xf32>
    %23 = arith.maximumf %21, %22 : vector<16x128xf32>
    %24 = arith.truncf %23 : vector<16x128xf32> to vector<16x128xbf16>
    %c0_18 = arith.constant 0 : index
    %c0_19 = arith.constant 0 : index
    %25 = vector.load %arg8[%c0_18, %c0_19] : memref<128x8xbf16, #tpu.memory_space<vmem>>, vector<128x8xbf16>
    %cst_20 = arith.constant dense<0.000000e+00> : vector<16x8xf32>
    %26 = tpu.matmul %24, %25, %cst_20 {dimension_numbers = #tpu.dot_dimension_numbers<[1], [0], [0], [1], [0, 0, 1, 1], [], []>} : vector<16x128xbf16>, vector<128x8xbf16>, vector<16x8xf32> -> vector<16x8xf32>
    %c0_21 = arith.constant 0 : index
    %c0_22 = arith.constant 0 : index
    %27 = vector.load %arg9[%c0_21, %c0_22] : memref<1x8xf32, #tpu.memory_space<vmem>>, vector<1x8xf32>
    %28 = vector.broadcast %27 : vector<1x8xf32> to vector<16x8xf32>
    %29 = arith.addf %26, %28 : vector<16x8xf32>
    %c0_23 = arith.constant 0 : index
    %c0_24 = arith.constant 0 : index
    %30 = vector.load %arg10[%c0_23, %c0_24] : memref<16x8xf32, #tpu.memory_space<vmem>>, vector<16x8xf32>
    tpu.vector_store %arg10[%c0_23, %c0_24], %29 {strides = array<i32>} : memref<16x8xf32, #tpu.memory_space<vmem>>, vector<16x8xf32>,
    return
  }
  func.func @transform_0(%arg0: i32) -> (i32, i32) {
    %c0_i32 = arith.constant 0 : i32
    %c0_i32_0 = arith.constant 0 : i32
    return %arg0, %c0_i32 : i32, i32
  }
  func.func @transform_1(%arg0: i32) -> (i32, i32) {
    %c0_i32 = arith.constant 0 : i32
    %c0_i32_0 = arith.constant 0 : i32
    %c0_i32_1 = arith.constant 0 : i32
    return %c0_i32, %c0_i32_0 : i32, i32
  }
  func.func @transform_2(%arg0: i32) -> (i32, i32) {
    %c0_i32 = arith.constant 0 : i32
    %c0_i32_0 = arith.constant 0 : i32
    %c0_i32_1 = arith.constant 0 : i32
    return %c0_i32, %c0_i32_0 : i32, i32
  }
  func.func @transform_3(%arg0: i32) -> (i32, i32) {
    %c0_i32 = arith.constant 0 : i32
    %c0_i32_0 = arith.constant 0 : i32
    %c0_i32_1 = arith.constant 0 : i32
    return %c0_i32, %c0_i32_0 : i32, i32
  }
  func.func @transform_4(%arg0: i32) -> (i32, i32) {
    %c0_i32 = arith.constant 0 : i32
    %c0_i32_0 = arith.constant 0 : i32
    %c0_i32_1 = arith.constant 0 : i32
    return %c0_i32, %c0_i32_0 : i32, i32
  }
  func.func @transform_5(%arg0: i32) -> (i32, i32) {
    %c0_i32 = arith.constant 0 : i32
    %c0_i32_0 = arith.constant 0 : i32
    %c0_i32_1 = arith.constant 0 : i32
    return %c0_i32, %c0_i32_0 : i32, i32
  }
  func.func @transform_6(%arg0: i32) -> (i32, i32) {
    %c0_i32 = arith.constant 0 : i32
    %c0_i32_0 = arith.constant 0 : i32
    %c0_i32_1 = arith.constant 0 : i32
    return %c0_i32, %c0_i32_0 : i32, i32
  }
  func.func @transform_7(%arg0: i32) -> (i32, i32) {
    %c0_i32 = arith.constant 0 : i32
    %c0_i32_0 = arith.constant 0 : i32
    %c0_i32_1 = arith.constant 0 : i32
    return %c0_i32, %c0_i32_0 : i32, i32
  }
  func.func @transform_8(%arg0: i32) -> (i32, i32) {
    %c0_i32 = arith.constant 0 : i32
    %c0_i32_0 = arith.constant 0 : i32
    %c0_i32_1 = arith.constant 0 : i32
    return %c0_i32, %c0_i32_0 : i32, i32
  }
  func.func @transform_9(%arg0: i32) -> (i32, i32) {
    %c0_i32 = arith.constant 0 : i32
    %c0_i32_0 = arith.constant 0 : i32
    return %arg0, %c0_i32 : i32, i32
  }
}

</mosaic_0001>

<llo_original>
// kernel: rating_model_forward.3
$region0: #{rating_model_forward.3}
  #allocation0 [shape = 'u32[]', space=smem, size = 0x4, offset = 0x4, fixed_abs, tag = 'smem constant byte address 0x4 - core index']
  #allocation1 [shape = 'u32[144,128]{1,0:T(1,128)}', space=vmem, size = 0x12000, scoped, tag = 'internal scratch']
  %s0 = inlined_call_operand.vmem [shape: bf16[16,32], index: 0, kind: input, shape index: {}]
  %s1 = inlined_call_operand.vmem [shape: bf16[32,128], index: 1, kind: input, shape index: {}]
  %s2 = inlined_call_operand.vmem [shape: f32[1,128], index: 2, kind: input, shape index: {}]
  %s3 = inlined_call_operand.vmem [shape: bf16[128,128], index: 3, kind: input, shape index: {}]
  %s4 = inlined_call_operand.vmem [shape: f32[1,128], index: 4, kind: input, shape index: {}]
  %s5 = inlined_call_operand.vmem [shape: bf16[128,128], index: 5, kind: input, shape index: {}]
  %s6 = inlined_call_operand.vmem [shape: f32[1,128], index: 6, kind: input, shape index: {}]
  %s7 = inlined_call_operand.vmem [shape: bf16[128,8], index: 7, kind: input, shape index: {}]
  %s8 = inlined_call_operand.vmem [shape: f32[1,8], index: 8, kind: input, shape index: {}]
  %s9 = inlined_call_operand.hbm [shape: f32[16,8], index: 9, kind: output, shape index: {}]
  %s10 = sld [smem:[#allocation0]]
  $region46: #{rating_model_forward.3} parent=0
    _
  %s12 = ssub.s32 1, %s10
  %s13 = scalar_select 0, %s12, %s10
  $region1: #{rating_model_forward.3} parent=0
    #allocation2 [shape = 'u8[8192]{0}', space=vmem, size = 0x2000, scoped, tag = 'output window, operand 0, single buffered']
    #allocation3 [shape = 's32[1]{0}', space=sflag, size = 0x4, scoped, tag = 'scoped memory for rating_model_forward.3']
    %14 = vsyncpa [#allocation3], 0
    // Predicated region
    $region2: #{rating_model_forward.3} parent=1 // pred_check
      _
    $region3: #{rating_model_forward.3} parent=1 // pred_check_branch
      %16 = sbr.rel (0) target = $region5
    $region4: #{rating_model_forward.3} parent=1 // pred_region
      _
    $region5: #{rating_model_forward.3} parent=1 // pred_fallthru
      _
    // Predicated region
    $region6: #{rating_model_forward.3} parent=1 // pred_check
      _
    $region7: #{rating_model_forward.3} parent=1 // pred_check_branch
      %18 = sbr.rel (0) target = $region9
    $region8: #{rating_model_forward.3} parent=1 // pred_region
      _
    $region9: #{rating_model_forward.3} parent=1 // pred_fallthru
      _
    // Predicated region
    $region10: #{rating_model_forward.3} parent=1 // pred_check
      _
    $region11: #{rating_model_forward.3} parent=1 // pred_check_branch
      %20 = sbr.rel (0) target = $region13
    $region12: #{rating_model_forward.3} parent=1 // pred_region
      _
    $region13: #{rating_model_forward.3} parent=1 // pred_fallthru
      _
    // Predicated region
    $region14: #{rating_model_forward.3} parent=1 // pred_check
      _
    $region15: #{rating_model_forward.3} parent=1 // pred_check_branch
      %22 = sbr.rel (0) target = $region17
    $region16: #{rating_model_forward.3} parent=1 // pred_region
      _
    $region17: #{rating_model_forward.3} parent=1 // pred_fallthru
      _
    // Predicated region
    $region18: #{rating_model_forward.3} parent=1 // pred_check
      _
    $region19: #{rating_model_forward.3} parent=1 // pred_check_branch
      %24 = sbr.rel (0) target = $region21
    $region20: #{rating_model_forward.3} parent=1 // pred_region
      _
    $region21: #{rating_model_forward.3} parent=1 // pred_fallthru
      _
    // Predicated region
    $region22: #{rating_model_forward.3} parent=1 // pred_check
      _
    $region23: #{rating_model_forward.3} parent=1 // pred_check_branch
      %26 = sbr.rel (0) target = $region25
    $region24: #{rating_model_forward.3} parent=1 // pred_region
      _
    $region25: #{rating_model_forward.3} parent=1 // pred_fallthru
      _
    // Predicated region
    $region26: #{rating_model_forward.3} parent=1 // pred_check
      _
    $region27: #{rating_model_forward.3} parent=1 // pred_check_branch
      %28 = sbr.rel (0) target = $region29
    $region28: #{rating_model_forward.3} parent=1 // pred_region
      _
    $region29: #{rating_model_forward.3} parent=1 // pred_fallthru
      _
    // Predicated region
    $region30: #{rating_model_forward.3} parent=1 // pred_check
      _
    $region31: #{rating_model_forward.3} parent=1 // pred_check_branch
      %30 = sbr.rel (0) target = $region33
    $region32: #{rating_model_forward.3} parent=1 // pred_region
      _
    $region33: #{rating_model_forward.3} parent=1 // pred_fallthru
      _
    // Predicated region
    $region34: #{rating_model_forward.3} parent=1 // pred_check
      _
    $region35: #{rating_model_forward.3} parent=1 // pred_check_branch
      %32 = sbr.rel (0) target = $region37
    $region36: #{rating_model_forward.3} parent=1 // pred_region
      _
    $region37: #{rating_model_forward.3} parent=1 // pred_fallthru
      _
    %v34 = vld [vmem:[%s0] sm:$0xf]
    %v35 = vld [vmem:[%s0 + $0x4] sm:$0xf]
    %v36 = vld [vmem:[%s1] sm:$0xf]
    %v37 = vld [vmem:[%s1 + $0x4] sm:$0xf]
    %v38 = vld [vmem:[%s1 + $0x8] sm:$0xf]
    %v39 = vld [vmem:[%s1 + $0xc] sm:$0xf]
    %v40 = vld [vmem:[%s2] sm:$0x1]
    %v42 = vlaneseq
    %v43 = vshrl.u32 %v42, 7
    %v44 = vsub.s32 0, %v43
    %v45 = vrot.slane %v40, %v44
    %v49 = vunpack.c.l.b16 %v34
    %v50 = vunpack.c.l.b16 %v35
    %v51 = vpack.c.b16 %v50, %v49
    %v56 = vunpack.c.l.b16 %v36
    %v57 = vunpack.c.l.b16 %v37
    %v58 = vunpack.c.l.b16 %v38
    %v59 = vunpack.c.l.b16 %v39
    %v60 = vpack.c.b16 %v57, %v56
    %v61 = vpack.c.b16 %v59, %v58
    %vm64 = vcmask 261120
    %v66 = vsel %vm64, %v51, 0
    %68 = vmatprep.subr.bf16.mxu0 0
    %69 = vmatpush1.bf16.msra.mxu0 %v60
    %70 = vmatprep.subr.bf16.mxu0 0
    %71 = vmatpush1.bf16.msra.mxu0 %v61
    %72 = vmatprep.subr.bf16.mxu0 0
    %73 = vmatpush1.bf16.msra.mxu0 0
    %74 = vmatprep.subr.bf16.mxu0 0
    %75 = vmatpush1.bf16.msra.mxu0 0
    %76 = vmatprep.subr.bf16.mxu0 0
    %77 = vmatpush1.bf16.msra.mxu0 0
    %78 = vmatprep.subr.bf16.mxu0 0
    %79 = vmatpush1.bf16.msra.mxu0 0
    %80 = vmatprep.subr.bf16.mxu0 0
    %81 = vmatpush1.bf16.msra.mxu0 0
    %82 = vmatprep.subr.bf16.mxu0 0
    %83 = vmatpush1.bf16.msra.mxu0 0
    %84 = vmatprep.subr.bf16.mxu0 0
    %85 = vmatpush1.bf16.msra.mxu0 0
    %86 = vmatprep.subr.bf16.mxu0 0
    %87 = vmatpush1.bf16.msra.mxu0 0
    %88 = vmatprep.subr.bf16.mxu0 0
    %89 = vmatpush1.bf16.msra.mxu0 0
    %90 = vmatprep.subr.bf16.mxu0 0
    %91 = vmatpush1.bf16.msra.mxu0 0
    %92 = vmatprep.subr.bf16.mxu0 0
    %93 = vmatpush1.bf16.msra.mxu0 0
    %94 = vmatprep.subr.bf16.mxu0 0
    %95 = vmatpush1.bf16.msra.mxu0 0
    %96 = vmatprep.subr.bf16.mxu0 0
    %97 = vmatpush1.bf16.msra.mxu0 0
    %98 = vmatprep.subr.bf16.mxu0 0
    %99 = vmatpush1.bf16.msra.mxu0 0
    %100 = vmatprep.mubr.bf16.mxu0 0
    %101 = vmatmul.mubr.bf16.gmra.mrb[0].mxu0 %v66
    %v102 = vpop.f32.mrb[0].mxu0
    %v103 = vadd.f32 %v45, %v102
    %v104 = vpop.f32.mrb[0].mxu0
    %v105 = vpop.f32.mrb[0].mxu0
    %v106 = vadd.f32 %v45, %v105
    %v107 = vpop.f32.mrb[0].mxu0
    %108 = vdwg.mxu0
    %v109 = vmax.f32 %v103, 0.0
    %v110 = vmax.f32 %v106, 0.0
    %v111 = vpack.c.bf16 %v110, %v109
    %v112 = vld [vmem:[%s3] sm:$0xf]
    %v113 = vld [vmem:[%s3 + $0x4] sm:$0xf]
    %v114 = vld [vmem:[%s3 + $0x8] sm:$0xf]
    %v115 = vld [vmem:[%s3 + $0xc] sm:$0xf]
    %v116 = vld [vmem:[%s3 + $0x10] sm:$0xf]
    %v117 = vld [vmem:[%s3 + $0x14] sm:$0xf]
    %v118 = vld [vmem:[%s3 + $0x18] sm:$0xf]
    %v119 = vld [vmem:[%s3 + $0x1c] sm:$0xf]
    %v120 = vld [vmem:[%s3 + $0x20] sm:$0xf]
    %v121 = vld [vmem:[%s3 + $0x24] sm:$0xf]
    %v122 = vld [vmem:[%s3 + $0x28] sm:$0xf]
    %v123 = vld [vmem:[%s3 + $0x2c] sm:$0xf]
    %v124 = vld [vmem:[%s3 + $0x30] sm:$0xf]
    %v125 = vld [vmem:[%s3 + $0x34] sm:$0xf]
    %v126 = vld [vmem:[%s3 + $0x38] sm:$0xf]
    %v127 = vld [vmem:[%s3 + $0x3c] sm:$0xf]
    %v128 = vld [vmem:[%s4] sm:$0x1]
    %v130 = vlaneseq
    %v131 = vshrl.u32 %v130, 7
    %v132 = vsub.s32 0, %v131
    %v133 = vrot.slane %v128, %v132
    %v151 = vunpack.c.l.b16 %v112
    %v152 = vunpack.c.l.b16 %v113
    %v153 = vunpack.c.l.b16 %v114
    %v154 = vunpack.c.l.b16 %v115
    %v155 = vunpack.c.l.b16 %v116
    %v156 = vunpack.c.l.b16 %v117
    %v157 = vunpack.c.l.b16 %v118
    %v158 = vunpack.c.l.b16 %v119
    %v159 = vunpack.c.l.b16 %v120
    %v160 = vunpack.c.l.b16 %v121
    %v161 = vunpack.c.l.b16 %v122
    %v162 = vunpack.c.l.b16 %v123
    %v163 = vunpack.c.l.b16 %v124
    %v164 = vunpack.c.l.b16 %v125
    %v165 = vunpack.c.l.b16 %v126
    %v166 = vunpack.c.l.b16 %v127
    %v167 = vpack.c.b16 %v152, %v151
    %v168 = vpack.c.b16 %v154, %v153
    %v169 = vpack.c.b16 %v156, %v155
    %v170 = vpack.c.b16 %v158, %v157
    %v171 = vpack.c.b16 %v160, %v159
    %v172 = vpack.c.b16 %v162, %v161
    %v173 = vpack.c.b16 %v164, %v163
    %v174 = vpack.c.b16 %v166, %v165
    %183 = vmatprep.subr.bf16.mxu0 0
    %184 = vmatpush1.bf16.msra.mxu0 %v167
    %185 = vmatprep.subr.bf16.mxu0 0
    %186 = vmatpush1.bf16.msra.mxu0 %v168
    %187 = vmatprep.subr.bf16.mxu0 0
    %188 = vmatpush1.bf16.msra.mxu0 %v169
    %189 = vmatprep.subr.bf16.mxu0 0
    %190 = vmatpush1.bf16.msra.mxu0 %v170
    %191 = vmatprep.subr.bf16.mxu0 0
    %192 = vmatpush1.bf16.msra.mxu0 %v171
    %193 = vmatprep.subr.bf16.mxu0 0
    %194 = vmatpush1.bf16.msra.mxu0 %v172
    %195 = vmatprep.subr.bf16.mxu0 0
    %196 = vmatpush1.bf16.msra.mxu0 %v173
    %197 = vmatprep.subr.bf16.mxu0 0
    %198 = vmatpush1.bf16.msra.mxu0 %v174
    %199 = vmatprep.subr.bf16.mxu0 0
    %200 = vmatpush1.bf16.msra.mxu0 0
    %201 = vmatprep.subr.bf16.mxu0 0
    %202 = vmatpush1.bf16.msra.mxu0 0
    %203 = vmatprep.subr.bf16.mxu0 0
    %204 = vmatpush1.bf16.msra.mxu0 0
    %205 = vmatprep.subr.bf16.mxu0 0
    %206 = vmatpush1.bf16.msra.mxu0 0
    %207 = vmatprep.subr.bf16.mxu0 0
    %208 = vmatpush1.bf16.msra.mxu0 0
    %209 = vmatprep.subr.bf16.mxu0 0
    %210 = vmatpush1.bf16.msra.mxu0 0
    %211 = vmatprep.subr.bf16.mxu0 0
    %212 = vmatpush1.bf16.msra.mxu0 0
    %213 = vmatprep.subr.bf16.mxu0 0
    %214 = vmatpush1.bf16.msra.mxu0 0
    %215 = vmatprep.mubr.bf16.mxu0 0
    %216 = vmatmul.mubr.bf16.gmra.mrb[0].mxu0 %v111
    %v217 = vpop.f32.mrb[0].mxu0
    %v218 = vadd.f32 %v133, %v217
    %v219 = vpop.f32.mrb[0].mxu0
    %v220 = vpop.f32.mrb[0].mxu0
    %v221 = vadd.f32 %v133, %v220
    %v222 = vpop.f32.mrb[0].mxu0
    %223 = vdwg.mxu0
    %v224 = vmax.f32 %v218, 0.0
    %v225 = vmax.f32 %v221, 0.0
    %v226 = vpack.c.bf16 %v225, %v224
    %v227 = vld [vmem:[%s5] sm:$0xf]
    %v228 = vld [vmem:[%s5 + $0x4] sm:$0xf]
    %v229 = vld [vmem:[%s5 + $0x8] sm:$0xf]
    %v230 = vld [vmem:[%s5 + $0xc] sm:$0xf]
    %v231 = vld [vmem:[%s5 + $0x10] sm:$0xf]
    %v232 = vld [vmem:[%s5 + $0x14] sm:$0xf]
    %v233 = vld [vmem:[%s5 + $0x18] sm:$0xf]
    %v234 = vld [vmem:[%s5 + $0x1c] sm:$0xf]
    %v235 = vld [vmem:[%s5 + $0x20] sm:$0xf]
    %v236 = vld [vmem:[%s5 + $0x24] sm:$0xf]
    %v237 = vld [vmem:[%s5 + $0x28] sm:$0xf]
    %v238 = vld [vmem:[%s5 + $0x2c] sm:$0xf]
    %v239 = vld [vmem:[%s5 + $0x30] sm:$0xf]
    %v240 = vld [vmem:[%s5 + $0x34] sm:$0xf]
    %v241 = vld [vmem:[%s5 + $0x38] sm:$0xf]
    %v242 = vld [vmem:[%s5 + $0x3c] sm:$0xf]
    %v243 = vld [vmem:[%s6] sm:$0x1]
    %v245 = vlaneseq
    %v246 = vshrl.u32 %v245, 7
    %v247 = vsub.s32 0, %v246
    %v248 = vrot.slane %v243, %v247
    %v266 = vunpack.c.l.b16 %v227
    %v267 = vunpack.c.l.b16 %v228
    %v268 = vunpack.c.l.b16 %v229
    %v269 = vunpack.c.l.b16 %v230
    %v270 = vunpack.c.l.b16 %v231
    %v271 = vunpack.c.l.b16 %v232
    %v272 = vunpack.c.l.b16 %v233
    %v273 = vunpack.c.l.b16 %v234
    %v274 = vunpack.c.l.b16 %v235
    %v275 = vunpack.c.l.b16 %v236
    %v276 = vunpack.c.l.b16 %v237
    %v277 = vunpack.c.l.b16 %v238
    %v278 = vunpack.c.l.b16 %v239
    %v279 = vunpack.c.l.b16 %v240
    %v280 = vunpack.c.l.b16 %v241
    %v281 = vunpack.c.l.b16 %v242
    %v282 = vpack.c.b16 %v267, %v266
    %v283 = vpack.c.b16 %v269, %v268
    %v284 = vpack.c.b16 %v271, %v270
    %v285 = vpack.c.b16 %v273, %v272
    %v286 = vpack.c.b16 %v275, %v274
    %v287 = vpack.c.b16 %v277, %v276
    %v288 = vpack.c.b16 %v279, %v278
    %v289 = vpack.c.b16 %v281, %v280
    %298 = vmatprep.subr.bf16.mxu0 0
    %299 = vmatpush1.bf16.msra.mxu0 %v282
    %300 = vmatprep.subr.bf16.mxu0 0
    %301 = vmatpush1.bf16.msra.mxu0 %v283
    %302 = vmatprep.subr.bf16.mxu0 0
    %303 = vmatpush1.bf16.msra.mxu0 %v284
    %304 = vmatprep.subr.bf16.mxu0 0
    %305 = vmatpush1.bf16.msra.mxu0 %v285
    %306 = vmatprep.subr.bf16.mxu0 0
    %307 = vmatpush1.bf16.msra.mxu0 %v286
    %308 = vmatprep.subr.bf16.mxu0 0
    %309 = vmatpush1.bf16.msra.mxu0 %v287
    %310 = vmatprep.subr.bf16.mxu0 0
    %311 = vmatpush1.bf16.msra.mxu0 %v288
    %312 = vmatprep.subr.bf16.mxu0 0
    %313 = vmatpush1.bf16.msra.mxu0 %v289
    %314 = vmatprep.subr.bf16.mxu0 0
    %315 = vmatpush1.bf16.msra.mxu0 0
    %316 = vmatprep.subr.bf16.mxu0 0
    %317 = vmatpush1.bf16.msra.mxu0 0
    %318 = vmatprep.subr.bf16.mxu0 0
    %319 = vmatpush1.bf16.msra.mxu0 0
    %320 = vmatprep.subr.bf16.mxu0 0
    %321 = vmatpush1.bf16.msra.mxu0 0
    %322 = vmatprep.subr.bf16.mxu0 0
    %323 = vmatpush1.bf16.msra.mxu0 0
    %324 = vmatprep.subr.bf16.mxu0 0
    %325 = vmatpush1.bf16.msra.mxu0 0
    %326 = vmatprep.subr.bf16.mxu0 0
    %327 = vmatpush1.bf16.msra.mxu0 0
    %328 = vmatprep.subr.bf16.mxu0 0
    %329 = vmatpush1.bf16.msra.mxu0 0
    %330 = vmatprep.mubr.bf16.mxu0 0
    %331 = vmatmul.mubr.bf16.gmra.mrb[0].mxu0 %v226
    %v332 = vpop.f32.mrb[0].mxu0
    %v333 = vadd.f32 %v248, %v332
    %v334 = vpop.f32.mrb[0].mxu0
    %v335 = vpop.f32.mrb[0].mxu0
    %v336 = vadd.f32 %v248, %v335
    %v337 = vpop.f32.mrb[0].mxu0
    %338 = vdwg.mxu0
    %v339 = vmax.f32 %v333, 0.0
    %v340 = vmax.f32 %v336, 0.0
    %v341 = vpack.c.bf16 %v340, %v339
    %v342 = vld [vmem:[%s7] sm:$0xf]
    %v343 = vld [vmem:[%s7 + $0x4] sm:$0xf]
    %v344 = vld [vmem:[%s7 + $0x8] sm:$0xf]
    %v345 = vld [vmem:[%s7 + $0xc] sm:$0xf]
    %v346 = vld [vmem:[%s7 + $0x10] sm:$0xf]
    %v347 = vld [vmem:[%s7 + $0x14] sm:$0xf]
    %v348 = vld [vmem:[%s7 + $0x18] sm:$0xf]
    %v349 = vld [vmem:[%s7 + $0x1c] sm:$0xf]
    %v350 = vld [vmem:[%s7 + $0x20] sm:$0xf]
    %v351 = vld [vmem:[%s7 + $0x24] sm:$0xf]
    %v352 = vld [vmem:[%s7 + $0x28] sm:$0xf]
    %v353 = vld [vmem:[%s7 + $0x2c] sm:$0xf]
    %v354 = vld [vmem:[%s7 + $0x30] sm:$0xf]
    %v355 = vld [vmem:[%s7 + $0x34] sm:$0xf]
    %v356 = vld [vmem:[%s7 + $0x38] sm:$0xf]
    %v357 = vld [vmem:[%s7 + $0x3c] sm:$0xf]
    %v358 = vld [vmem:[%s8] sm:$0x1]
    %v360 = vlaneseq
    %v361 = vshrl.u32 %v360, 7
    %v362 = vsub.s32 0, %v361
    %v363 = vrot.slane %v358, %v362
    %v381 = vunpack.c.l.b16 %v342
    %v382 = vunpack.c.l.b16 %v343
    %v383 = vunpack.c.l.b16 %v344
    %v384 = vunpack.c.l.b16 %v345
    %v385 = vunpack.c.l.b16 %v346
    %v386 = vunpack.c.l.b16 %v347
    %v387 = vunpack.c.l.b16 %v348
    %v388 = vunpack.c.l.b16 %v349
    %v389 = vunpack.c.l.b16 %v350
    %v390 = vunpack.c.l.b16 %v351
    %v391 = vunpack.c.l.b16 %v352
    %v392 = vunpack.c.l.b16 %v353
    %v393 = vunpack.c.l.b16 %v354
    %v394 = vunpack.c.l.b16 %v355
    %v395 = vunpack.c.l.b16 %v356
    %v396 = vunpack.c.l.b16 %v357
    %v397 = vpack.c.b16 %v382, %v381
    %v398 = vpack.c.b16 %v384, %v383
    %v399 = vpack.c.b16 %v386, %v385
    %v400 = vpack.c.b16 %v388, %v387
    %v401 = vpack.c.b16 %v390, %v389
    %v402 = vpack.c.b16 %v392, %v391
    %v403 = vpack.c.b16 %v394, %v393
    %v404 = vpack.c.b16 %v396, %v395
    %413 = vmatprep.subr.bf16.mxu0 0
    %414 = vmatpush1.bf16.msra.mxu0 %v397
    %415 = vmatprep.subr.bf16.mxu0 0
    %416 = vmatpush1.bf16.msra.mxu0 %v398
    %417 = vmatprep.subr.bf16.mxu0 0
    %418 = vmatpush1.bf16.msra.mxu0 %v399
    %419 = vmatprep.subr.bf16.mxu0 0
    %420 = vmatpush1.bf16.msra.mxu0 %v400
    %421 = vmatprep.subr.bf16.mxu0 0
    %422 = vmatpush1.bf16.msra.mxu0 %v401
    %423 = vmatprep.subr.bf16.mxu0 0
    %424 = vmatpush1.bf16.msra.mxu0 %v402
    %425 = vmatprep.subr.bf16.mxu0 0
    %426 = vmatpush1.bf16.msra.mxu0 %v403
    %427 = vmatprep.subr.bf16.mxu0 0
    %428 = vmatpush1.bf16.msra.mxu0 %v404
    %429 = vmatprep.subr.bf16.mxu0 0
    %430 = vmatpush1.bf16.msra.mxu0 0
    %431 = vmatprep.subr.bf16.mxu0 0
    %432 = vmatpush1.bf16.msra.mxu0 0
    %433 = vmatprep.subr.bf16.mxu0 0
    %434 = vmatpush1.bf16.msra.mxu0 0
    %435 = vmatprep.subr.bf16.mxu0 0
    %436 = vmatpush1.bf16.msra.mxu0 0
    %437 = vmatprep.subr.bf16.mxu0 0
    %438 = vmatpush1.bf16.msra.mxu0 0
    %439 = vmatprep.subr.bf16.mxu0 0
    %440 = vmatpush1.bf16.msra.mxu0 0
    %441 = vmatprep.subr.bf16.mxu0 0
    %442 = vmatpush1.bf16.msra.mxu0 0
    %443 = vmatprep.subr.bf16.mxu0 0
    %444 = vmatpush1.bf16.msra.mxu0 0
    %445 = vmatprep.mubr.bf16.mxu0 0
    %446 = vmatmul.mubr.bf16.gmra.mrb[0].mxu0 %v341
    %v447 = vpop.f32.mrb[0].mxu0
    %v448 = vadd.f32 %v363, %v447
    %v449 = vpop.f32.mrb[0].mxu0
    %v450 = vpop.f32.mrb[0].mxu0
    %v451 = vadd.f32 %v363, %v450
    %v452 = vpop.f32.mrb[0].mxu0
    %453 = vdwg.mxu0
    %vm454 = vcmask 64512
    %455 = vst.msk [vmem:[#allocation2] sm:$0xff] %vm454, %v448
    %456 = vst.msk [vmem:[#allocation2 + $0x8] sm:$0xff] %vm454, %v451
    // Predicated region
    $region38: #{rating_model_forward.3} parent=1 // pred_check
      _
    $region39: #{rating_model_forward.3} parent=1 // pred_check_branch
      %458 = sbr.rel (0) target = $region41
    $region40: #{rating_model_forward.3} parent=1 // pred_region
      %s460 = ssub.s32 256, 256
      %461 = vsyncadd [#allocation3], %s460
      %s462 = sshll.u32 [#allocation2], 4
      %s463 = int_to_ptr.vmem [resolvable:$true] %s462
      %468 = dma.vmem_to_hbm [thread:$0]  %s463, 256, %s9, [#allocation3], 128, 128, 8
    $region41: #{rating_model_forward.3} parent=1 // pred_fallthru
      _
    // Predicated region
    $region42: #{rating_model_forward.3} parent=1 // pred_check
      _
    $region43: #{rating_model_forward.3} parent=1 // pred_check_branch
      %470 = sbr.rel (0) target = $region45
    $region44: #{rating_model_forward.3} parent=1 // pred_region
      %471 = dma.done [#allocation3], 256
    $region45: #{rating_model_forward.3} parent=1 // pred_fallthru
      _
    %472 = vsyncpa [#allocation3], 1

</llo_original>
